<compile_context>
chip_gen: v5e
topology: v5e:2x2
jax: 0.10.0
libtpu: 0.0.40
codegen_flags: <defaults>
</compile_context>

<pallas_src>
import functools

import jax
import jax.numpy as jnp
from jax import lax
from jax.experimental import pallas as pl
from jax.experimental.pallas import tpu as pltpu


def _biased_attention_kernel(x_ref, wqkv_ref, wo_ref, bias_ref, out_ref, pre_ref, *,
                             num_heads, compute_dtype):
    # x_ref:    (1, S, H)       one batch row
    # wqkv_ref: (H, 3H)         [W_Q * scale | W_K | W_V], compute dtype
    # wo_ref:   (H, H)          W_O, compute dtype
    # bias_ref: (1, NH, S, S)   this batch row's additive bias
    # out_ref:  (1, S, H)       final output (lane-dense store)
    # pre_ref:  (1, S, H)       pre-W_O attention output (lane-dense store)
    S = x_ref.shape[1]
    H = x_ref.shape[2]
    d = H // num_heads

    xc = x_ref[0].astype(compute_dtype)                                   # (S, H)

    # One wide QKV projection fills the MXU: (S,H) @ (H,3H), f32 accumulation.
    qkv = jnp.dot(xc, wqkv_ref[...], preferred_element_type=jnp.float32)  # (S, 3H) f32
    q = qkv[:, :H].astype(compute_dtype)          # 1/sqrt(d) already folded into W_Q
    k = qkv[:, H:2 * H].astype(compute_dtype)
    v = qkv[:, 2 * H:].astype(compute_dtype)

    pre_cols = []
    for h in range(num_heads):                    # static unroll; NH is a config const
        qh = q[:, h * d:(h + 1) * d]
        kh = k[:, h * d:(h + 1) * d]
        vh = v[:, h * d:(h + 1) * d]
        # Contract the d axes directly -> (S, S); no k transpose materialized.
        s = lax.dot_general(qh, kh, (((1,), (1,)), ((), ())),
                            preferred_element_type=jnp.float32)
        s = s + bias_ref[0, h].astype(jnp.float32)
        m = jnp.max(s, axis=-1, keepdims=True)
        p = jnp.exp(s - m)
        denom = jnp.sum(p, axis=-1, keepdims=True)
        p = p * pl.reciprocal(denom, approx=False)              # exact reciprocal
        pre_cols.append(jnp.dot(p.astype(compute_dtype), vh,
                                preferred_element_type=jnp.float32))      # (S, d) f32

    pre = jnp.concatenate(pre_cols, axis=-1)                              # (S, H) f32
    pre_ref[0] = pre.astype(pre_ref.dtype)                                # lane-dense

    out = jnp.dot(pre.astype(compute_dtype), wo_ref[...],
                  preferred_element_type=jnp.float32)                     # (S, H) f32
    out_ref[0] = out.astype(out_ref.dtype)                                # lane-dense


def biased_attention(x, attn_bias, w_q, w_k, w_v, w_o, *, num_heads,
                     compute_dtype=jnp.bfloat16):
    """x: (B,S,H); attn_bias: (B,NH,S,S); w_*: (H,H) stored (in, out) == W_pt.T."""
    B, S, H = x.shape
    NH = num_heads
    assert H % NH == 0
    assert attn_bias.shape == (B, NH, S, S)
    scale = (H / NH) ** (-0.5)

    # Fold the score scale into W_Q, fuse the three projections into one (H,3H) slab
    # and cast weights to the compute dtype (trace-time plumbing, zero kernel cost).
    w_qkv = jnp.concatenate([w_q * scale, w_k, w_v], axis=1).astype(compute_dtype)
    w_o_c = w_o.astype(compute_dtype)

    # VMEM budget: double-buffered DMA blocks + f32 temporaries, with headroom.
    # Cap at ~85% of physical VMEM (v7x: ~54 MiB of 64; v5e/v6e: ~108 MiB of 128),
    # but never request less than the computed requirement.
    x_item = jnp.dtype(x.dtype).itemsize
    comp_item = jnp.dtype(compute_dtype).itemsize
    bias_item = jnp.dtype(attn_bias.dtype).itemsize
    blk_bytes = (S * H * x_item                       # x block
                 + 3 * H * H * comp_item              # W_QKV
                 + H * H * comp_item                  # W_O
                 + NH * S * S * bias_item             # bias row
                 + 2 * S * H * x_item)                # out + pre blocks
    tmp_bytes = (3 * S * H * 4                        # qkv f32
                 + 3 * S * H * comp_item              # q/k/v compute copies
                 + 2 * S * S * 4                      # score + prob f32 (per head)
                 + S * H * 4)                         # pre f32
    need = int(2 * blk_bytes + 4 * tmp_bytes + (2 << 20))
    try:
        cap = int(pltpu.get_tpu_info().vmem_capacity_bytes)
    except Exception:
        cap = 64 * 2**20                              # safe fallback (v7x-sized)
    budget = int(cap * 0.85)
    vmem_limit = max(min(max(need, 16 * 2**20), budget), need)

    out, pre = pl.pallas_call(
        functools.partial(_biased_attention_kernel, num_heads=NH,
                          compute_dtype=compute_dtype),
        out_shape=(jax.ShapeDtypeStruct((B, S, H), x.dtype),
                   jax.ShapeDtypeStruct((B, S, H), x.dtype)),
        grid_spec=pltpu.PrefetchScalarGridSpec(
            num_scalar_prefetch=0,
            grid=(B,),
            in_specs=[
                pl.BlockSpec((1, S, H), lambda b: (b, 0, 0)),         # x row
                pl.BlockSpec((H, 3 * H), lambda b: (0, 0)),           # W_QKV (resident)
                pl.BlockSpec((H, H), lambda b: (0, 0)),               # W_O (resident)
                pl.BlockSpec((1, NH, S, S), lambda b: (b, 0, 0, 0)),  # bias row
            ],
            out_specs=[
                pl.BlockSpec((1, S, H), lambda b: (b, 0, 0)),         # out
                pl.BlockSpec((1, S, H), lambda b: (b, 0, 0)),         # pre
            ],
        ),
        compiler_params=pltpu.CompilerParams(
            dimension_semantics=("parallel",),
            vmem_limit_bytes=vmem_limit),
    )(x, w_qkv, w_o_c, attn_bias)

    return out, pre


def _reference(x, attn_bias, w_q, w_k, w_v, w_o, num_heads):
    B, S, H = x.shape
    d = H // num_heads
    scale = (H / num_heads) ** (-0.5)
    Q = (x @ w_q).reshape(B, S, num_heads, d)
    K = (x @ w_k).reshape(B, S, num_heads, d)
    V = (x @ w_v).reshape(B, S, num_heads, d)
    attn = jnp.einsum('bqhd,bkhd->bhqk', Q, K) * scale + attn_bias
    attn = jax.nn.softmax(attn, axis=-1)
    pre = jnp.einsum('bhqk,bkhd->bqhd', attn, V).reshape(B, S, H)
    return pre @ w_o, pre


if __name__ == "__main__":
    B, S, H, NH = 2, 8, 32, 4

    key = jax.random.PRNGKey(0)
    k_x, k_b, k_q, k_k, k_v, k_o = jax.random.split(key, 6)

    x = jax.random.normal(k_x, (B, S, H), dtype=jnp.float32)
    attn_bias = jax.random.normal(k_b, (B, NH, S, S), dtype=jnp.float32)

    # Deterministic synthetic parameters, (in, out) layout == PyTorch weight.T.
    w_scale = 1.0 / (H ** 0.5)
    w_q = jax.random.uniform(k_q, (H, H), jnp.float32, -w_scale, w_scale)
    w_k = jax.random.uniform(k_k, (H, H), jnp.float32, -w_scale, w_scale)
    w_v = jax.random.uniform(k_v, (H, H), jnp.float32, -w_scale, w_scale)
    w_o = jax.random.uniform(k_o, (H, H), jnp.float32, -w_scale, w_scale)

    fwd = jax.jit(functools.partial(biased_attention, num_heads=NH))
    out, pre = fwd(x, attn_bias, w_q, w_k, w_v, w_o)
    out = jax.block_until_ready(out)
    pre = jax.block_until_ready(pre)

    ref_out, ref_pre = _reference(x, attn_bias, w_q, w_k, w_v, w_o, NH)
    # Tolerance accounts for bf16 MXU operands (f32 accumulation) vs the f32 reference.
    assert jnp.allclose(out, ref_out, atol=2e-2, rtol=2e-2)
    assert jnp.allclose(pre, ref_pre, atol=2e-2, rtol=2e-2)

    print("KERNEL_OK")
</pallas_src>

<mosaic_0001>
module attributes {stable_mosaic.version = 11 : i64} {
  func.func @_biased_attention_kernel(%arg0: i32, %arg1: memref<1x8x32xf32, #tpu.memory_space<vmem>>, %arg2: memref<32x96xbf16, #tpu.memory_space<vmem>>, %arg3: memref<32x32xbf16, #tpu.memory_space<vmem>>, %arg4: memref<1x4x8x8xf32, #tpu.memory_space<vmem>>, %arg5: memref<1x8x32xf32, #tpu.memory_space<vmem>>, %arg6: memref<1x8x32xf32, #tpu.memory_space<vmem>>) attributes {dimension_semantics = [#tpu.dimension_semantics<parallel>], iteration_bounds = array<i64: 2>, scalar_prefetch = 0 : i64, scratch_operands = 0 : i64, tpu.core_type = #tpu.core_type<tc>, window_params = [{transform_indices = @transform_0, window_bounds = array<i64: 1, 8, 32>}, {pipeline_mode = #tpu.pipeline_mode<synchronous>, transform_indices = @transform_1, window_bounds = array<i64: 32, 96>}, {pipeline_mode = #tpu.pipeline_mode<synchronous>, transform_indices = @transform_2, window_bounds = array<i64: 32, 32>}, {transform_indices = @transform_3, window_bounds = array<i64: 1, 4, 8, 8>}, {transform_indices = @transform_4, window_bounds = array<i64: 1, 8, 32>}, {transform_indices = @transform_5, window_bounds = array<i64: 1, 8, 32>}]} {
    %c0 = arith.constant 0 : index
    %c0_0 = arith.constant 0 : index
    %c0_1 = arith.constant 0 : index
    %0 = vector.load %arg1[%c0, %c0_0, %c0_1] : memref<1x8x32xf32, #tpu.memory_space<vmem>>, vector<1x8x32xf32>
    %1 = vector.shape_cast %0 : vector<1x8x32xf32> to vector<8x32xf32>
    %2 = arith.truncf %1 : vector<8x32xf32> to vector<8x32xbf16>
    %c0_2 = arith.constant 0 : index
    %c0_3 = arith.constant 0 : index
    %3 = vector.load %arg2[%c0_2, %c0_3] : memref<32x96xbf16, #tpu.memory_space<vmem>>, vector<32x96xbf16>
    %cst = arith.constant dense<0.000000e+00> : vector<8x96xf32>
    %4 = tpu.matmul %2, %3, %cst {dimension_numbers = #tpu.dot_dimension_numbers<[1], [0], [0], [1], [0, 0, 1, 1], [], []>} : vector<8x32xbf16>, vector<32x96xbf16>, vector<8x96xf32> -> vector<8x96xf32>
    %5 = vector.extract_strided_slice %4 {offsets = [0, 0], sizes = [8, 32], strides = [1, 1]} : vector<8x96xf32> to vector<8x32xf32>
    %6 = arith.truncf %5 : vector<8x32xf32> to vector<8x32xbf16>
    %7 = vector.extract_strided_slice %4 {offsets = [0, 32], sizes = [8, 32], strides = [1, 1]} : vector<8x96xf32> to vector<8x32xf32>
    %8 = arith.truncf %7 : vector<8x32xf32> to vector<8x32xbf16>
    %9 = vector.extract_strided_slice %4 {offsets = [0, 64], sizes = [8, 32], strides = [1, 1]} : vector<8x96xf32> to vector<8x32xf32>
    %10 = arith.truncf %9 : vector<8x32xf32> to vector<8x32xbf16>
    %11 = vector.extract_strided_slice %6 {offsets = [0, 0], sizes = [8, 8], strides = [1, 1]} : vector<8x32xbf16> to vector<8x8xbf16>
    %12 = vector.extract_strided_slice %8 {offsets = [0, 0], sizes = [8, 8], strides = [1, 1]} : vector<8x32xbf16> to vector<8x8xbf16>
    %13 = vector.extract_strided_slice %10 {offsets = [0, 0], sizes = [8, 8], strides = [1, 1]} : vector<8x32xbf16> to vector<8x8xbf16>
    %cst_4 = arith.constant dense<0.000000e+00> : vector<8x8xf32>
    %14 = tpu.matmul %11, %12, %cst_4 {dimension_numbers = #tpu.dot_dimension_numbers<[1], [1], [0], [0], [0, 0, 1, 0], [], []>} : vector<8x8xbf16>, vector<8x8xbf16>, vector<8x8xf32> -> vector<8x8xf32>
    %c0_5 = arith.constant 0 : index
    %c0_6 = arith.constant 0 : index
    %c0_7 = arith.constant 0 : index
    %c0_8 = arith.constant 0 : index
    %15 = vector.load %arg4[%c0_5, %c0_6, %c0_7, %c0_8] : memref<1x4x8x8xf32, #tpu.memory_space<vmem>>, vector<1x1x8x8xf32>
    %16 = vector.shape_cast %15 : vector<1x1x8x8xf32> to vector<8x8xf32>
    %17 = arith.addf %14, %16 : vector<8x8xf32>
    %cst_9 = arith.constant dense<0xFF800000> : vector<8xf32>
    %18 = vector.multi_reduction <maximumf>, %17, %cst_9 [1] : vector<8x8xf32> to vector<8xf32>
    %19 = vector.shape_cast %18 : vector<8xf32> to vector<8x1xf32>
    %20 = vector.broadcast %19 : vector<8x1xf32> to vector<8x8xf32>
    %21 = arith.subf %17, %20 : vector<8x8xf32>
    %22 = math.exp %21 : vector<8x8xf32>
    %cst_10 = arith.constant dense<0.000000e+00> : vector<8xf32>
    %23 = vector.multi_reduction <add>, %22, %cst_10 [1] : vector<8x8xf32> to vector<8xf32>
    %24 = vector.shape_cast %23 : vector<8xf32> to vector<8x1xf32>
    %25 = tpu.reciprocal %24 : vector<8x1xf32> -> vector<8x1xf32>
    %26 = vector.broadcast %25 : vector<8x1xf32> to vector<8x8xf32>
    %27 = arith.mulf %22, %26 : vector<8x8xf32>
    %28 = arith.truncf %27 : vector<8x8xf32> to vector<8x8xbf16>
    %cst_11 = arith.constant dense<0.000000e+00> : vector<8x8xf32>
    %29 = tpu.matmul %28, %13, %cst_11 {dimension_numbers = #tpu.dot_dimension_numbers<[1], [0], [0], [1], [0, 0, 1, 1], [], []>} : vector<8x8xbf16>, vector<8x8xbf16>, vector<8x8xf32> -> vector<8x8xf32>
    %30 = vector.extract_strided_slice %6 {offsets = [0, 8], sizes = [8, 8], strides = [1, 1]} : vector<8x32xbf16> to vector<8x8xbf16>
    %31 = vector.extract_strided_slice %8 {offsets = [0, 8], sizes = [8, 8], strides = [1, 1]} : vector<8x32xbf16> to vector<8x8xbf16>
    %32 = vector.extract_strided_slice %10 {offsets = [0, 8], sizes = [8, 8], strides = [1, 1]} : vector<8x32xbf16> to vector<8x8xbf16>
    %cst_12 = arith.constant dense<0.000000e+00> : vector<8x8xf32>
    %33 = tpu.matmul %30, %31, %cst_12 {dimension_numbers = #tpu.dot_dimension_numbers<[1], [1], [0], [0], [0, 0, 1, 0], [], []>} : vector<8x8xbf16>, vector<8x8xbf16>, vector<8x8xf32> -> vector<8x8xf32>
    %c0_13 = arith.constant 0 : index
    %c1 = arith.constant 1 : index
    %c0_14 = arith.constant 0 : index
    %c0_15 = arith.constant 0 : index
    %34 = vector.load %arg4[%c0_13, %c1, %c0_14, %c0_15] : memref<1x4x8x8xf32, #tpu.memory_space<vmem>>, vector<1x1x8x8xf32>
    %35 = vector.shape_cast %34 : vector<1x1x8x8xf32> to vector<8x8xf32>
    %36 = arith.addf %33, %35 : vector<8x8xf32>
    %cst_16 = arith.constant dense<0xFF800000> : vector<8xf32>
    %37 = vector.multi_reduction <maximumf>, %36, %cst_16 [1] : vector<8x8xf32> to vector<8xf32>
    %38 = vector.shape_cast %37 : vector<8xf32> to vector<8x1xf32>
    %39 = vector.broadcast %38 : vector<8x1xf32> to vector<8x8xf32>
    %40 = arith.subf %36, %39 : vector<8x8xf32>
    %41 = math.exp %40 : vector<8x8xf32>
    %cst_17 = arith.constant dense<0.000000e+00> : vector<8xf32>
    %42 = vector.multi_reduction <add>, %41, %cst_17 [1] : vector<8x8xf32> to vector<8xf32>
    %43 = vector.shape_cast %42 : vector<8xf32> to vector<8x1xf32>
    %44 = tpu.reciprocal %43 : vector<8x1xf32> -> vector<8x1xf32>
    %45 = vector.broadcast %44 : vector<8x1xf32> to vector<8x8xf32>
    %46 = arith.mulf %41, %45 : vector<8x8xf32>
    %47 = arith.truncf %46 : vector<8x8xf32> to vector<8x8xbf16>
    %cst_18 = arith.constant dense<0.000000e+00> : vector<8x8xf32>
    %48 = tpu.matmul %47, %32, %cst_18 {dimension_numbers = #tpu.dot_dimension_numbers<[1], [0], [0], [1], [0, 0, 1, 1], [], []>} : vector<8x8xbf16>, vector<8x8xbf16>, vector<8x8xf32> -> vector<8x8xf32>
    %49 = vector.extract_strided_slice %6 {offsets = [0, 16], sizes = [8, 8], strides = [1, 1]} : vector<8x32xbf16> to vector<8x8xbf16>
    %50 = vector.extract_strided_slice %8 {offsets = [0, 16], sizes = [8, 8], strides = [1, 1]} : vector<8x32xbf16> to vector<8x8xbf16>
    %51 = vector.extract_strided_slice %10 {offsets = [0, 16], sizes = [8, 8], strides = [1, 1]} : vector<8x32xbf16> to vector<8x8xbf16>
    %cst_19 = arith.constant dense<0.000000e+00> : vector<8x8xf32>
    %52 = tpu.matmul %49, %50, %cst_19 {dimension_numbers = #tpu.dot_dimension_numbers<[1], [1], [0], [0], [0, 0, 1, 0], [], []>} : vector<8x8xbf16>, vector<8x8xbf16>, vector<8x8xf32> -> vector<8x8xf32>
    %c0_20 = arith.constant 0 : index
    %c2 = arith.constant 2 : index
    %c0_21 = arith.constant 0 : index
    %c0_22 = arith.constant 0 : index
    %53 = vector.load %arg4[%c0_20, %c2, %c0_21, %c0_22] : memref<1x4x8x8xf32, #tpu.memory_space<vmem>>, vector<1x1x8x8xf32>
    %54 = vector.shape_cast %53 : vector<1x1x8x8xf32> to vector<8x8xf32>
    %55 = arith.addf %52, %54 : vector<8x8xf32>
    %cst_23 = arith.constant dense<0xFF800000> : vector<8xf32>
    %56 = vector.multi_reduction <maximumf>, %55, %cst_23 [1] : vector<8x8xf32> to vector<8xf32>
    %57 = vector.shape_cast %56 : vector<8xf32> to vector<8x1xf32>
    %58 = vector.broadcast %57 : vector<8x1xf32> to vector<8x8xf32>
    %59 = arith.subf %55, %58 : vector<8x8xf32>
    %60 = math.exp %59 : vector<8x8xf32>
    %cst_24 = arith.constant dense<0.000000e+00> : vector<8xf32>
    %61 = vector.multi_reduction <add>, %60, %cst_24 [1] : vector<8x8xf32> to vector<8xf32>
    %62 = vector.shape_cast %61 : vector<8xf32> to vector<8x1xf32>
    %63 = tpu.reciprocal %62 : vector<8x1xf32> -> vector<8x1xf32>
    %64 = vector.broadcast %63 : vector<8x1xf32> to vector<8x8xf32>
    %65 = arith.mulf %60, %64 : vector<8x8xf32>
    %66 = arith.truncf %65 : vector<8x8xf32> to vector<8x8xbf16>
    %cst_25 = arith.constant dense<0.000000e+00> : vector<8x8xf32>
    %67 = tpu.matmul %66, %51, %cst_25 {dimension_numbers = #tpu.dot_dimension_numbers<[1], [0], [0], [1], [0, 0, 1, 1], [], []>} : vector<8x8xbf16>, vector<8x8xbf16>, vector<8x8xf32> -> vector<8x8xf32>
    %68 = vector.extract_strided_slice %6 {offsets = [0, 24], sizes = [8, 8], strides = [1, 1]} : vector<8x32xbf16> to vector<8x8xbf16>
    %69 = vector.extract_strided_slice %8 {offsets = [0, 24], sizes = [8, 8], strides = [1, 1]} : vector<8x32xbf16> to vector<8x8xbf16>
    %70 = vector.extract_strided_slice %10 {offsets = [0, 24], sizes = [8, 8], strides = [1, 1]} : vector<8x32xbf16> to vector<8x8xbf16>
    %cst_26 = arith.constant dense<0.000000e+00> : vector<8x8xf32>
    %71 = tpu.matmul %68, %69, %cst_26 {dimension_numbers = #tpu.dot_dimension_numbers<[1], [1], [0], [0], [0, 0, 1, 0], [], []>} : vector<8x8xbf16>, vector<8x8xbf16>, vector<8x8xf32> -> vector<8x8xf32>
    %c0_27 = arith.constant 0 : index
    %c3 = arith.constant 3 : index
    %c0_28 = arith.constant 0 : index
    %c0_29 = arith.constant 0 : index
    %72 = vector.load %arg4[%c0_27, %c3, %c0_28, %c0_29] : memref<1x4x8x8xf32, #tpu.memory_space<vmem>>, vector<1x1x8x8xf32>
    %73 = vector.shape_cast %72 : vector<1x1x8x8xf32> to vector<8x8xf32>
    %74 = arith.addf %71, %73 : vector<8x8xf32>
    %cst_30 = arith.constant dense<0xFF800000> : vector<8xf32>
    %75 = vector.multi_reduction <maximumf>, %74, %cst_30 [1] : vector<8x8xf32> to vector<8xf32>
    %76 = vector.shape_cast %75 : vector<8xf32> to vector<8x1xf32>
    %77 = vector.broadcast %76 : vector<8x1xf32> to vector<8x8xf32>
    %78 = arith.subf %74, %77 : vector<8x8xf32>
    %79 = math.exp %78 : vector<8x8xf32>
    %cst_31 = arith.constant dense<0.000000e+00> : vector<8xf32>
    %80 = vector.multi_reduction <add>, %79, %cst_31 [1] : vector<8x8xf32> to vector<8xf32>
    %81 = vector.shape_cast %80 : vector<8xf32> to vector<8x1xf32>
    %82 = tpu.reciprocal %81 : vector<8x1xf32> -> vector<8x1xf32>
    %83 = vector.broadcast %82 : vector<8x1xf32> to vector<8x8xf32>
    %84 = arith.mulf %79, %83 : vector<8x8xf32>
    %85 = arith.truncf %84 : vector<8x8xf32> to vector<8x8xbf16>
    %cst_32 = arith.constant dense<0.000000e+00> : vector<8x8xf32>
    %86 = tpu.matmul %85, %70, %cst_32 {dimension_numbers = #tpu.dot_dimension_numbers<[1], [0], [0], [1], [0, 0, 1, 1], [], []>} : vector<8x8xbf16>, vector<8x8xbf16>, vector<8x8xf32> -> vector<8x8xf32>
    %87 = tpu.concatenate %29, %48, %67, %86 in 1 : vector<8x8xf32>, vector<8x8xf32>, vector<8x8xf32>, vector<8x8xf32> -> vector<8x32xf32>
    %c0_33 = arith.constant 0 : index
    %c0_34 = arith.constant 0 : index
    %c0_35 = arith.constant 0 : index
    %88 = vector.load %arg6[%c0_33, %c0_34, %c0_35] : memref<1x8x32xf32, #tpu.memory_space<vmem>>, vector<1x8x32xf32>
    %89 = vector.shape_cast %88 : vector<1x8x32xf32> to vector<8x32xf32>
    %90 = vector.shape_cast %87 : vector<8x32xf32> to vector<1x8x32xf32>
    tpu.vector_store %arg6[%c0_33, %c0_34, %c0_35], %90 {strides = array<i32>} : memref<1x8x32xf32, #tpu.memory_space<vmem>>, vector<1x8x32xf32>,
    %91 = arith.truncf %87 : vector<8x32xf32> to vector<8x32xbf16>
    %c0_36 = arith.constant 0 : index
    %c0_37 = arith.constant 0 : index
    %92 = vector.load %arg3[%c0_36, %c0_37] : memref<32x32xbf16, #tpu.memory_space<vmem>>, vector<32x32xbf16>
    %cst_38 = arith.constant dense<0.000000e+00> : vector<8x32xf32>
    %93 = tpu.matmul %91, %92, %cst_38 {dimension_numbers = #tpu.dot_dimension_numbers<[1], [0], [0], [1], [0, 0, 1, 1], [], []>} : vector<8x32xbf16>, vector<32x32xbf16>, vector<8x32xf32> -> vector<8x32xf32>
    %c0_39 = arith.constant 0 : index
    %c0_40 = arith.constant 0 : index
    %c0_41 = arith.constant 0 : index
    %94 = vector.load %arg5[%c0_39, %c0_40, %c0_41] : memref<1x8x32xf32, #tpu.memory_space<vmem>>, vector<1x8x32xf32>
    %95 = vector.shape_cast %94 : vector<1x8x32xf32> to vector<8x32xf32>
    %96 = vector.shape_cast %93 : vector<8x32xf32> to vector<1x8x32xf32>
    tpu.vector_store %arg5[%c0_39, %c0_40, %c0_41], %96 {strides = array<i32>} : memref<1x8x32xf32, #tpu.memory_space<vmem>>, vector<1x8x32xf32>,
    return
  }
  func.func @transform_0(%arg0: i32) -> (i32, i32, i32) {
    %c0_i32 = arith.constant 0 : i32
    %c0_i32_0 = arith.constant 0 : i32
    %c0_i32_1 = arith.constant 0 : i32
    return %arg0, %c0_i32, %c0_i32_0 : i32, i32, i32
  }
  func.func @transform_1(%arg0: i32) -> (i32, i32) {
    %c0_i32 = arith.constant 0 : i32
    %c0_i32_0 = arith.constant 0 : i32
    %c0_i32_1 = arith.constant 0 : i32
    return %c0_i32, %c0_i32_0 : i32, i32
  }
  func.func @transform_2(%arg0: i32) -> (i32, i32) {
    %c0_i32 = arith.constant 0 : i32
    %c0_i32_0 = arith.constant 0 : i32
    %c0_i32_1 = arith.constant 0 : i32
    return %c0_i32, %c0_i32_0 : i32, i32
  }
  func.func @transform_3(%arg0: i32) -> (i32, i32, i32, i32) {
    %c0_i32 = arith.constant 0 : i32
    %c0_i32_0 = arith.constant 0 : i32
    %c0_i32_1 = arith.constant 0 : i32
    %c0_i32_2 = arith.constant 0 : i32
    return %arg0, %c0_i32, %c0_i32_0, %c0_i32_1 : i32, i32, i32, i32
  }
  func.func @transform_4(%arg0: i32) -> (i32, i32, i32) {
    %c0_i32 = arith.constant 0 : i32
    %c0_i32_0 = arith.constant 0 : i32
    %c0_i32_1 = arith.constant 0 : i32
    return %arg0, %c0_i32, %c0_i32_0 : i32, i32, i32
  }
  func.func @transform_5(%arg0: i32) -> (i32, i32, i32) {
    %c0_i32 = arith.constant 0 : i32
    %c0_i32_0 = arith.constant 0 : i32
    %c0_i32_1 = arith.constant 0 : i32
    return %arg0, %c0_i32, %c0_i32_0 : i32, i32, i32
  }
}

</mosaic_0001>

<llo_original>
// kernel: biased_attention.1
$region0: #{biased_attention.1}
  #allocation0 [shape = 'u32[]', space=smem, size = 0x4, offset = 0x4, fixed_abs, tag = 'smem constant byte address 0x4 - core index']
  #allocation1 [shape = 'u32[72,128]{1,0:T(1,128)}', space=vmem, size = 0x9000, scoped, tag = 'internal scratch']
  %s0 = inlined_call_operand.vmem [shape: f32[2,8,32], index: 0, kind: input, shape index: {}]
  %s1 = inlined_call_operand.vmem [shape: bf16[32,96], index: 1, kind: input, shape index: {}]
  %s2 = inlined_call_operand.vmem [shape: bf16[32,32], index: 2, kind: input, shape index: {}]
  %s3 = inlined_call_operand.vmem [shape: f32[2,4,8,8], index: 3, kind: input, shape index: {}]
  %s4 = inlined_call_operand.hbm [shape: f32[2,8,32], index: 4, kind: output, shape index: {0}]
  %s5 = inlined_call_operand.hbm [shape: f32[2,8,32], index: 5, kind: output, shape index: {1}]
  %6 = xla_tuple %s4, %s5
  %s7 = sld [smem:[#allocation0]]
  $region57: #{biased_attention.1} parent=0
    _
  %s9 = ssub.s32 1, %s7
  %s10 = scalar_select 0, %s9, %s7
  $region1: #{biased_attention.1} parent=0
    #allocation2 [shape = 'u8[8192]{0}', space=vmem, size = 0x2000, scoped, tag = 'output window, operand 0']
    #allocation3 [shape = 's32[2]{0}', space=sflag, size = 0x8, scoped, tag = 'scoped memory for biased_attention.1']
    #allocation4 [shape = 'u8[8192]{0}', space=vmem, size = 0x2000, scoped, tag = 'output window, operand 1']
    #allocation5 [shape = 's32[2]{0}', space=sflag, size = 0x8, scoped, tag = 'scoped memory for biased_attention.1']
    %11 = vsyncpa [#allocation3], 0
    %s12 = scalar_lea.sflag [#allocation3], 1
    %13 = vsyncpa %s12, 0
    %14 = vsyncpa [#allocation5], 0
    %s15 = scalar_lea.sflag [#allocation5], 1
    %16 = vsyncpa %s15, 0
    loop: start=0, step=1, limit=4
    $region2: #{biased_attention.1} parent=1 // loop_pre_header
      _
    $region3: #{biased_attention.1} parent=1 // loop_header
      %s18 = sphi 0, %s22
      %p19 = scmp.ge.s32.totalorder %s18, 4
      %s28 = sphi 0, %s30
      %s31 = sphi 0, %s28
      %s32 = sphi 0, %s31
      %s48 = sphi 0, %s32
      %s52 = sphi 0, %s52
      %s54 = sphi 0, %s52
      %s55 = sphi 0, %s54
      %s69 = sphi 0, %s55
      %s73 = sphi 0, %s73
      %s75 = sphi 0, %s73
      %s76 = sphi 0, %s75
      %s90 = sphi 0, %s76
      %s96 = sphi 0, %s98
      %s99 = sphi 0, %s96
      %s100 = sphi 0, %s99
      %s116 = sphi 0, %s100
      %s122 = sphi 0, %s124
      %s125 = sphi 0, %s122
      %s126 = sphi 0, %s125
      %s142 = sphi 0, %s126
      %s148 = sphi 0, %s150
      %s151 = sphi 0, %s148
      %s152 = sphi 0, %s151
      %s168 = sphi 0, %s152
    $region4: #{biased_attention.1} parent=1 // loop_header_branch
      %21 = sbr.rel (%p19) target = $region8
    $region5: #{biased_attention.1} parent=1 // loop_body
      %s23 = ssub.s32 %s18, 1
      %s24 = ssub.s32 %s18, 2
      %s25 = sadd.s32 %s18, 1
      %s26 = ssub.s32 %s18, %s25
      %p27 = scmp.eq.s32.totalorder %s26, 0
      %s29 = sadd.s32 %s28, 1
      %s30 = scalar_select %p27, %s28, %s29
      %p33 = pneg %p27
      %p34 = scmp.eq.s32.totalorder %s18, 1
      %p35 = por %p33, %p34
      %p36 = scmp.ne.s32.totalorder %s28, %s31
      %p37 = scmp.eq.s32.totalorder %s18, 0
      %p38 = por %p36, %p37
      %p39 = scmp.ne.s32.totalorder %s28, %s31
      %p40 = scmp.eq.s32.totalorder %s23, 1
      %p41 = por %p39, %p40
      %p42 = scmp.ne.s32.totalorder %s31, %s32
      %p43 = scmp.eq.s32.totalorder %s23, 0
      %p44 = por %p42, %p43
      %p45 = scmp.ne.s32.totalorder %s31, %s32
      %p46 = scmp.eq.s32.totalorder %s24, 1
      %p47 = por %p45, %p46
      %p49 = scmp.ne.s32.totalorder %s32, %s48
      %p50 = scmp.eq.s32.totalorder %s24, 0
      %p51 = por %p49, %p50
      %s53 = sadd.s32 %s52, 1
      %p56 = scmp.eq.s32.totalorder %s18, 1
      %p57 = scmp.ne.s32.totalorder %s52, %s54
      %p58 = scmp.eq.s32.totalorder %s18, 0
      %p59 = por %p57, %p58
      %p60 = scmp.ne.s32.totalorder %s52, %s54
      %p61 = scmp.eq.s32.totalorder %s23, 1
      %p62 = por %p60, %p61
      %p63 = scmp.ne.s32.totalorder %s54, %s55
      %p64 = scmp.eq.s32.totalorder %s23, 0
      %p65 = por %p63, %p64
      %p66 = scmp.ne.s32.totalorder %s54, %s55
      %p67 = scmp.eq.s32.totalorder %s24, 1
      %p68 = por %p66, %p67
      %p70 = scmp.ne.s32.totalorder %s55, %s69
      %p71 = scmp.eq.s32.totalorder %s24, 0
      %p72 = por %p70, %p71
      %s74 = sadd.s32 %s73, 1
      %p77 = scmp.eq.s32.totalorder %s18, 1
      %p78 = scmp.ne.s32.totalorder %s73, %s75
      %p79 = scmp.eq.s32.totalorder %s18, 0
      %p80 = por %p78, %p79
      %p81 = scmp.ne.s32.totalorder %s73, %s75
      %p82 = scmp.eq.s32.totalorder %s23, 1
      %p83 = por %p81, %p82
      %p84 = scmp.ne.s32.totalorder %s75, %s76
      %p85 = scmp.eq.s32.totalorder %s23, 0
      %p86 = por %p84, %p85
      %p87 = scmp.ne.s32.totalorder %s75, %s76
      %p88 = scmp.eq.s32.totalorder %s24, 1
      %p89 = por %p87, %p88
      %p91 = scmp.ne.s32.totalorder %s76, %s90
      %p92 = scmp.eq.s32.totalorder %s24, 0
      %p93 = por %p91, %p92
      %s94 = ssub.s32 %s18, %s25
      %p95 = scmp.eq.s32.totalorder %s94, 0
      %s97 = sadd.s32 %s96, 1
      %s98 = scalar_select %p95, %s96, %s97
      %p101 = pneg %p95
      %p102 = scmp.eq.s32.totalorder %s18, 1
      %p103 = por %p101, %p102
      %p104 = scmp.ne.s32.totalorder %s96, %s99
      %p105 = scmp.eq.s32.totalorder %s18, 0
      %p106 = por %p104, %p105
      %p107 = scmp.ne.s32.totalorder %s96, %s99
      %p108 = scmp.eq.s32.totalorder %s23, 1
      %p109 = por %p107, %p108
      %p110 = scmp.ne.s32.totalorder %s99, %s100
      %p111 = scmp.eq.s32.totalorder %s23, 0
      %p112 = por %p110, %p111
      %p113 = scmp.ne.s32.totalorder %s99, %s100
      %p114 = scmp.eq.s32.totalorder %s24, 1
      %p115 = por %p113, %p114
      %p117 = scmp.ne.s32.totalorder %s100, %s116
      %p118 = scmp.eq.s32.totalorder %s24, 0
      %p119 = por %p117, %p118
      %s120 = ssub.s32 %s18, %s25
      %p121 = scmp.eq.s32.totalorder %s120, 0
      %s123 = sadd.s32 %s122, 1
      %s124 = scalar_select %p121, %s122, %s123
      %p127 = pneg %p121
      %p128 = scmp.eq.s32.totalorder %s18, 1
      %p129 = por %p127, %p128
      %p130 = scmp.ne.s32.totalorder %s122, %s125
      %p131 = scmp.eq.s32.totalorder %s18, 0
      %p132 = por %p130, %p131
      %p133 = scmp.ne.s32.totalorder %s122, %s125
      %p134 = scmp.eq.s32.totalorder %s23, 1
      %p135 = por %p133, %p134
      %p136 = scmp.ne.s32.totalorder %s125, %s126
      %p137 = scmp.eq.s32.totalorder %s23, 0
      %p138 = por %p136, %p137
      %p139 = scmp.ne.s32.totalorder %s125, %s126
      %p140 = scmp.eq.s32.totalorder %s24, 1
      %p141 = por %p139, %p140
      %p143 = scmp.ne.s32.totalorder %s126, %s142
      %p144 = scmp.eq.s32.totalorder %s24, 0
      %p145 = por %p143, %p144
      %s146 = ssub.s32 %s18, %s25
      %p147 = scmp.eq.s32.totalorder %s146, 0
      %s149 = sadd.s32 %s148, 1
      %s150 = scalar_select %p147, %s148, %s149
      %p153 = pneg %p147
      %p154 = scmp.eq.s32.totalorder %s18, 1
      %p155 = por %p153, %p154
      %p156 = scmp.ne.s32.totalorder %s148, %s151
      %p157 = scmp.eq.s32.totalorder %s18, 0
      %p158 = por %p156, %p157
      %p159 = scmp.ne.s32.totalorder %s148, %s151
      %p160 = scmp.eq.s32.totalorder %s23, 1
      %p161 = por %p159, %p160
      %p162 = scmp.ne.s32.totalorder %s151, %s152
      %p163 = scmp.eq.s32.totalorder %s23, 0
      %p164 = por %p162, %p163
      %p165 = scmp.ne.s32.totalorder %s151, %s152
      %p166 = scmp.eq.s32.totalorder %s24, 1
      %p167 = por %p165, %p166
      %p169 = scmp.ne.s32.totalorder %s152, %s168
      %p170 = scmp.eq.s32.totalorder %s24, 0
      %p171 = por %p169, %p170
      %p172 = scmp.le.s32.totalorder 1, %s18
      %p173 = scmp.lt.s32.totalorder %s18, 3
      %p174 = pnand %p172, %p173
      %p175 = pneg %p174
      // Predicated region
      $region9: #{biased_attention.1} parent=5 // pred_check
        _
      $region10: #{biased_attention.1} parent=5 // pred_check_branch
        %177 = sbr.rel (%p174) target = $region12
      $region11: #{biased_attention.1} parent=5 // pred_region
        %s178 = ssub.s32 %s18, 1
        // Predicated region
        $region13: #{biased_attention.1} parent=11 // pred_check
          %p179 = pneg %p65
        $region14: #{biased_attention.1} parent=11 // pred_check_branch
          %181 = sbr.rel (%p179) target = $region16
        $region15: #{biased_attention.1} parent=11 // pred_region
          _
        $region16: #{biased_attention.1} parent=11 // pred_fallthru
          _
        // Predicated region
        $region17: #{biased_attention.1} parent=11 // pred_check
          %p182 = pneg %p86
        $region18: #{biased_attention.1} parent=11 // pred_check_branch
          %184 = sbr.rel (%p182) target = $region20
        $region19: #{biased_attention.1} parent=11 // pred_region
          _
        $region20: #{biased_attention.1} parent=11 // pred_fallthru
          _
      $region12: #{biased_attention.1} parent=5 // pred_fallthru
        _
      %p185 = scmp.lt.s32.totalorder %s18, 2
      // Predicated region
      $region21: #{biased_attention.1} parent=5 // pred_check
        %p186 = pneg %p185
      $region22: #{biased_attention.1} parent=5 // pred_check_branch
        %188 = sbr.rel (%p186) target = $region24
      $region23: #{biased_attention.1} parent=5 // pred_region
        // Predicated region
        $region25: #{biased_attention.1} parent=23 // pred_check
          %p189 = pneg %p38
        $region26: #{biased_attention.1} parent=23 // pred_check_branch
          %191 = sbr.rel (%p189) target = $region28
        $region27: #{biased_attention.1} parent=23 // pred_region
          %p192 = scmp.lt.s32.totalorder %s18, 1
          %s193 = scalar_select %p192, %s18, 1
          %s194 = smul.addr %s193, 8
          %s195 = scalar_lea.vmem %s0, %s194
        $region28: #{biased_attention.1} parent=23 // pred_fallthru
          _
        // Predicated region
        $region29: #{biased_attention.1} parent=23 // pred_check
          %p196 = pneg %p106
        $region30: #{biased_attention.1} parent=23 // pred_check_branch
          %198 = sbr.rel (%p196) target = $region32
        $region31: #{biased_attention.1} parent=23 // pred_region
          %p199 = scmp.lt.s32.totalorder %s18, 1
          %s200 = scalar_select %p199, %s18, 1
          %s201 = smul.addr %s200, 4
          %s202 = smul.addr %s201, 8
          %s203 = scalar_lea.vmem %s3, %s202
        $region32: #{biased_attention.1} parent=23 // pred_fallthru
          _
      $region24: #{biased_attention.1} parent=5 // pred_fallthru
        _
      %p204 = scmp.le.s32.totalorder 1, %s18
      %p205 = scmp.lt.s32.totalorder %s18, 3
      %p206 = pnand %p204, %p205
      %p207 = pneg %p206
      // Predicated region
      $region33: #{biased_attention.1} parent=5 // pred_check
        _
      $region34: #{biased_attention.1} parent=5 // pred_check_branch
        %209 = sbr.rel (%p206) target = $region36
      $region35: #{biased_attention.1} parent=5 // pred_region
        %s210 = ssub.s32 %s18, 1
        %p211 = scmp.lt.s32.totalorder %s23, 1
        %s212 = scalar_select %p211, %s23, 1
        %s213 = smul.addr %s212, 8
        %s214 = scalar_lea.vmem %s0, %s213
        %p215 = pneg %p44
        %p216 = pneg %p41
        %p217 = pneg %p65
        %p218 = pneg %p62
        %p219 = pneg %p86
        %p220 = pneg %p83
        %p221 = scmp.lt.s32.totalorder %s23, 1
        %s222 = scalar_select %p221, %s23, 1
        %s223 = smul.addr %s222, 4
        %s224 = smul.addr %s223, 8
        %s225 = scalar_lea.vmem %s3, %s224
        %p226 = pneg %p112
        %p227 = pneg %p109
        %p228 = pneg %p138
        %p229 = pneg %p135
        %s230 = sand.u32 %s125, 1
        %s231 = scalar_lea.sflag [#allocation3], %s230
        %s232 = sand.u32 %s125, 1
        %s233 = smul.addr %s232, 8
        %s234 = scalar_lea.vmem [#allocation2], %s233
        %p235 = pneg %p164
        %p236 = pneg %p161
        %s237 = sand.u32 %s151, 1
        %s238 = scalar_lea.sflag [#allocation5], %s237
        %s239 = sand.u32 %s151, 1
        %s240 = smul.addr %s239, 8
        %s241 = scalar_lea.vmem [#allocation4], %s240
        %p242 = scmp.lt.s32.totalorder %s23, 1
        %s243 = scalar_select %p242, %s23, 1
        %s244 = smul.addr %s243, 8
        %s245 = scalar_lea.vmem %s0, %s244
        %p246 = scmp.lt.s32.totalorder %s23, 1
        %s247 = scalar_select %p246, %s23, 1
        %s248 = smul.addr %s247, 4
        %s249 = smul.addr %s248, 8
        %s250 = scalar_lea.vmem %s3, %s249
        %v252 = vld [vmem:[%s245] sm:$0xff]
        %v253 = vpack.c.bf16 %v252, %v252
        %v254 = vld [vmem:[%s1] sm:$0xf]
        %v255 = vld [vmem:[%s1 + $0x4] sm:$0xf]
        %v256 = vld [vmem:[%s1 + $0x8] sm:$0xf]
        %v257 = vld [vmem:[%s1 + $0xc] sm:$0xf]
        %v262 = vunpack.c.l.b16 %v254
        %v263 = vunpack.c.l.b16 %v255
        %v264 = vunpack.c.l.b16 %v256
        %v265 = vunpack.c.l.b16 %v257
        %v266 = vpack.c.b16 %v263, %v262
        %v267 = vpack.c.b16 %v265, %v264
        %vm270 = vcmask 261120
        %v272 = vsel %vm270, %v253, 0
        %274 = vmatpush.bf16.msra.mxu0 0
        %275 = vmatpush.bf16.msra.mxu0 0
        %276 = vmatpush.bf16.msra.mxu0 0
        %277 = vmatpush.bf16.msra.mxu0 0
        %278 = vmatpush.bf16.msra.mxu0 0
        %279 = vmatpush.bf16.msra.mxu0 0
        %280 = vmatpush.bf16.msra.mxu0 %v267
        %281 = vmatpush.bf16.msra.mxu0 %v266
        %282 = vmatmul.bf16.gmra.mxu0 %v272
        %v283 = vpop.f32.mrf.mxu0
        %v284 = vadd.f32 0.0, %v283
        %v285 = vpop.f32.mrf.mxu0
        %286 = vdwg.mxu0
        %v287 = vpack.c.bf16 %v284, %v284
        %v288 = vld [vmem:[%s250] sm:$0xff]
        %v290 = vunpack.c.l.b16 %v287
        %v291 = vpack.c.b16 %v290, %v290
        %292 = vrot.lane.b32.xlu0 %v291, 96
        %v293 = vpop.permute.xlu0 %292
        %vm294 = vcmask 64512
        %v296 = vsel %vm294, %v287, 0
        %v299 = vsel %vm294, %v293, 0
        %301 = vmatpush.bf16.xpose.msra.mxu0 0
        %302 = vmatpush.bf16.xpose.msra.mxu0 0
        %303 = vmatpush.bf16.xpose.msra.mxu0 0
        %304 = vmatpush.bf16.xpose.msra.mxu0 0
        %305 = vmatpush.bf16.xpose.msra.mxu0 0
        %306 = vmatpush.bf16.xpose.msra.mxu0 0
        %307 = vmatpush.bf16.xpose.msra.mxu0 0
        %308 = vmatpush.bf16.xpose.msra.mxu0 %v299
        %309 = vmatmul.bf16.gmra.mxu0 %v296
        %v310 = vpop.f32.mrf.mxu0
        %v311 = vadd.f32 %v288, %v310
        %v312 = vpop.f32.mrf.mxu0
        %313 = vdwg.mxu0
        %v314 = vsel %vm294, %v311, -inf
        %315 = vmax.xlane.f32.xlu0 %v314
        %v316 = vpop.xlane.xlu0 %315
        %v317 = vsub.f32 %v311, %v316
        %v318 = vmul.f32 %v317, 1.442695
        %v319 = vpow.pop %v318
        %v320 = vsel %vm294, %v319, 0.0
        %321 = vadd.xlane.f32.xlu0 %v320
        %v322 = vpop.xlane.xlu0 %321
        %v323 = vrcp.pop %v322
        %v324 = vmul.f32 %v322, %v323
        %v325 = vsub.f32 1.0, %v324
        %v326 = vmul.f32 %v323, %v325
        %v327 = vadd.f32 %v323, %v326
        %vm328 = vweird.f32 %v322
        %vm329 = vweird.f32 %v323
        %vm330 = vmor %vm328, %vm329
        %v331 = vsel %vm330, %v323, %v327
        %v332 = vand.u32 2147483647, %v322
        %vm333 = vcmp.eq.f32.partialorder %v332, 8.507059e+37
        %v334 = vand.u32 %v322, 2147483648
        %v335 = vor.u32 1.1754944e-38, %v334
        %v336 = vsel %vm333, %v335, %v331
        %v337 = vmul.f32 %v319, %v336
        %v338 = vpack.c.bf16 %v337, %v337
        %339 = vrot.lane.b32.xlu0 %v291, 64
        %v340 = vpop.permute.xlu0 %339
        %v342 = vsel %vm294, %v338, 0
        %vm344 = vcmask 1043456
        %v346 = vsel %vm344, %v340, 0
        %348 = vmatpush.bf16.msra.mxu0 0
        %349 = vmatpush.bf16.msra.mxu0 0
        %350 = vmatpush.bf16.msra.mxu0 0
        %351 = vmatpush.bf16.msra.mxu0 0
        %352 = vmatpush.bf16.msra.mxu0 0
        %353 = vmatpush.bf16.msra.mxu0 0
        %354 = vmatpush.bf16.msra.mxu0 0
        %355 = vmatpush.bf16.msra.mxu0 %v346
        %356 = vmatmul.bf16.gmra.mxu0 %v342
        %v357 = vpop.f32.mrf.mxu0
        %v358 = vadd.f32 0.0, %v357
        %v359 = vpop.f32.mrf.mxu0
        %360 = vdwg.mxu0
        %s361 = scalar_lea.vmem %s250, 8
        %v362 = vld [vmem:[%s361] sm:$0xff]
        %363 = vrot.lane.b32.xlu0 %v291, 120
        %v364 = vpop.permute.xlu0 %363
        %365 = vrot.lane.b32.xlu0 %v291, 88
        %v366 = vpop.permute.xlu0 %365
        %v368 = vsel %vm294, %v364, 0
        %v371 = vsel %vm294, %v366, 0
        %373 = vmatpush.bf16.xpose.msra.mxu0 0
        %374 = vmatpush.bf16.xpose.msra.mxu0 0
        %375 = vmatpush.bf16.xpose.msra.mxu0 0
        %376 = vmatpush.bf16.xpose.msra.mxu0 0
        %377 = vmatpush.bf16.xpose.msra.mxu0 0
        %378 = vmatpush.bf16.xpose.msra.mxu0 0
        %379 = vmatpush.bf16.xpose.msra.mxu0 0
        %380 = vmatpush.bf16.xpose.msra.mxu0 %v371
        %381 = vmatmul.bf16.gmra.mxu0 %v368
        %v382 = vpop.f32.mrf.mxu0
        %v383 = vadd.f32 %v362, %v382
        %v384 = vpop.f32.mrf.mxu0
        %385 = vdwg.mxu0
        %v386 = vsel %vm294, %v383, -inf
        %387 = vmax.xlane.f32.xlu0 %v386
        %v388 = vpop.xlane.xlu0 %387
        %v389 = vsub.f32 %v383, %v388
        %v390 = vmul.f32 %v389, 1.442695
        %v391 = vpow.pop %v390
        %v392 = vsel %vm294, %v391, 0.0
        %393 = vadd.xlane.f32.xlu0 %v392
        %v394 = vpop.xlane.xlu0 %393
        %v395 = vrcp.pop %v394
        %v396 = vmul.f32 %v394, %v395
        %v397 = vsub.f32 1.0, %v396
        %v398 = vmul.f32 %v395, %v397
        %v399 = vadd.f32 %v395, %v398
        %vm400 = vweird.f32 %v394
        %vm401 = vweird.f32 %v395
        %vm402 = vmor %vm400, %vm401
        %v403 = vsel %vm402, %v395, %v399
        %v404 = vand.u32 2147483647, %v394
        %vm405 = vcmp.eq.f32.partialorder %v404, 8.507059e+37
        %v406 = vand.u32 %v394, 2147483648
        %v407 = vor.u32 1.1754944e-38, %v406
        %v408 = vsel %vm405, %v407, %v403
        %v409 = vmul.f32 %v391, %v408
        %v410 = vpack.c.bf16 %v409, %v409
        %411 = vrot.lane.b32.xlu0 %v291, 56
        %v412 = vpop.permute.xlu0 %411
        %v414 = vsel %vm294, %v410, 0
        %v417 = vsel %vm344, %v412, 0
        %419 = vmatpush.bf16.msra.mxu0 0
        %420 = vmatpush.bf16.msra.mxu0 0
        %421 = vmatpush.bf16.msra.mxu0 0
        %422 = vmatpush.bf16.msra.mxu0 0
        %423 = vmatpush.bf16.msra.mxu0 0
        %424 = vmatpush.bf16.msra.mxu0 0
        %425 = vmatpush.bf16.msra.mxu0 0
        %426 = vmatpush.bf16.msra.mxu0 %v417
        %427 = vmatmul.bf16.gmra.mxu0 %v414
        %v428 = vpop.f32.mrf.mxu0
        %v429 = vadd.f32 0.0, %v428
        %v430 = vpop.f32.mrf.mxu0
        %431 = vdwg.mxu0
        %s432 = scalar_lea.vmem %s250, 16
        %v433 = vld [vmem:[%s432] sm:$0xff]
        %434 = vrot.lane.b32.xlu0 %v291, 112
        %v435 = vpop.permute.xlu0 %434
        %436 = vrot.lane.b32.xlu0 %v291, 80
        %v437 = vpop.permute.xlu0 %436
        %v439 = vsel %vm294, %v435, 0
        %v442 = vsel %vm294, %v437, 0
        %444 = vmatpush.bf16.xpose.msra.mxu0 0
        %445 = vmatpush.bf16.xpose.msra.mxu0 0
        %446 = vmatpush.bf16.xpose.msra.mxu0 0
        %447 = vmatpush.bf16.xpose.msra.mxu0 0
        %448 = vmatpush.bf16.xpose.msra.mxu0 0
        %449 = vmatpush.bf16.xpose.msra.mxu0 0
        %450 = vmatpush.bf16.xpose.msra.mxu0 0
        %451 = vmatpush.bf16.xpose.msra.mxu0 %v442
        %452 = vmatmul.bf16.gmra.mxu0 %v439
        %v453 = vpop.f32.mrf.mxu0
        %v454 = vadd.f32 %v433, %v453
        %v455 = vpop.f32.mrf.mxu0
        %456 = vdwg.mxu0
        %v457 = vsel %vm294, %v454, -inf
        %458 = vmax.xlane.f32.xlu0 %v457
        %v459 = vpop.xlane.xlu0 %458
        %v460 = vsub.f32 %v454, %v459
        %v461 = vmul.f32 %v460, 1.442695
        %v462 = vpow.pop %v461
        %v463 = vsel %vm294, %v462, 0.0
        %464 = vadd.xlane.f32.xlu0 %v463
        %v465 = vpop.xlane.xlu0 %464
        %v466 = vrcp.pop %v465
        %v467 = vmul.f32 %v465, %v466
        %v468 = vsub.f32 1.0, %v467
        %v469 = vmul.f32 %v466, %v468
        %v470 = vadd.f32 %v466, %v469
        %vm471 = vweird.f32 %v465
        %vm472 = vweird.f32 %v466
        %vm473 = vmor %vm471, %vm472
        %v474 = vsel %vm473, %v466, %v470
        %v475 = vand.u32 2147483647, %v465
        %vm476 = vcmp.eq.f32.partialorder %v475, 8.507059e+37
        %v477 = vand.u32 %v465, 2147483648
        %v478 = vor.u32 1.1754944e-38, %v477
        %v479 = vsel %vm476, %v478, %v474
        %v480 = vmul.f32 %v462, %v479
        %v481 = vpack.c.bf16 %v480, %v480
        %482 = vrot.lane.b32.xlu0 %v291, 48
        %v483 = vpop.permute.xlu0 %482
        %v485 = vsel %vm294, %v481, 0
        %v488 = vsel %vm344, %v483, 0
        %490 = vmatpush.bf16.msra.mxu0 0
        %491 = vmatpush.bf16.msra.mxu0 0
        %492 = vmatpush.bf16.msra.mxu0 0
        %493 = vmatpush.bf16.msra.mxu0 0
        %494 = vmatpush.bf16.msra.mxu0 0
        %495 = vmatpush.bf16.msra.mxu0 0
        %496 = vmatpush.bf16.msra.mxu0 0
        %497 = vmatpush.bf16.msra.mxu0 %v488
        %498 = vmatmul.bf16.gmra.mxu0 %v485
        %v499 = vpop.f32.mrf.mxu0
        %v500 = vadd.f32 0.0, %v499
        %v501 = vpop.f32.mrf.mxu0
        %502 = vdwg.mxu0
        %s503 = scalar_lea.vmem %s250, 24
        %v504 = vld [vmem:[%s503] sm:$0xff]
        %505 = vrot.lane.b32.xlu0 %v291, 104
        %v506 = vpop.permute.xlu0 %505
        %507 = vrot.lane.b32.xlu0 %v291, 72
        %v508 = vpop.permute.xlu0 %507
        %v510 = vsel %vm294, %v506, 0
        %v513 = vsel %vm294, %v508, 0
        %515 = vmatpush.bf16.xpose.msra.mxu0 0
        %516 = vmatpush.bf16.xpose.msra.mxu0 0
        %517 = vmatpush.bf16.xpose.msra.mxu0 0
        %518 = vmatpush.bf16.xpose.msra.mxu0 0
        %519 = vmatpush.bf16.xpose.msra.mxu0 0
        %520 = vmatpush.bf16.xpose.msra.mxu0 0
        %521 = vmatpush.bf16.xpose.msra.mxu0 0
        %522 = vmatpush.bf16.xpose.msra.mxu0 %v513
        %523 = vmatmul.bf16.gmra.mxu0 %v510
        %v524 = vpop.f32.mrf.mxu0
        %v525 = vadd.f32 %v504, %v524
        %v526 = vpop.f32.mrf.mxu0
        %527 = vdwg.mxu0
        %v528 = vsel %vm294, %v525, -inf
        %529 = vmax.xlane.f32.xlu0 %v528
        %v530 = vpop.xlane.xlu0 %529
        %v531 = vsub.f32 %v525, %v530
        %v532 = vmul.f32 %v531, 1.442695
        %v533 = vpow.pop %v532
        %v534 = vsel %vm294, %v533, 0.0
        %535 = vadd.xlane.f32.xlu0 %v534
        %v536 = vpop.xlane.xlu0 %535
        %v537 = vrcp.pop %v536
        %v538 = vmul.f32 %v536, %v537
        %v539 = vsub.f32 1.0, %v538
        %v540 = vmul.f32 %v537, %v539
        %v541 = vadd.f32 %v537, %v540
        %vm542 = vweird.f32 %v536
        %vm543 = vweird.f32 %v537
        %vm544 = vmor %vm542, %vm543
        %v545 = vsel %vm544, %v537, %v541
        %v546 = vand.u32 2147483647, %v536
        %vm547 = vcmp.eq.f32.partialorder %v546, 8.507059e+37
        %v548 = vand.u32 %v536, 2147483648
        %v549 = vor.u32 1.1754944e-38, %v548
        %v550 = vsel %vm547, %v549, %v545
        %v551 = vmul.f32 %v533, %v550
        %v552 = vpack.c.bf16 %v551, %v551
        %553 = vrot.lane.b32.xlu0 %v291, 40
        %v554 = vpop.permute.xlu0 %553
        %v556 = vsel %vm294, %v552, 0
        %v559 = vsel %vm344, %v554, 0
        %561 = vmatpush.bf16.msra.mxu0 0
        %562 = vmatpush.bf16.msra.mxu0 0
        %563 = vmatpush.bf16.msra.mxu0 0
        %564 = vmatpush.bf16.msra.mxu0 0
        %565 = vmatpush.bf16.msra.mxu0 0
        %566 = vmatpush.bf16.msra.mxu0 0
        %567 = vmatpush.bf16.msra.mxu0 0
        %568 = vmatpush.bf16.msra.mxu0 %v559
        %569 = vmatmul.bf16.gmra.mxu0 %v556
        %v570 = vpop.f32.mrf.mxu0
        %v571 = vadd.f32 0.0, %v570
        %v572 = vpop.f32.mrf.mxu0
        %573 = vdwg.mxu0
        %575 = vrot.lane.b32.xlu0 %v429, 8
        %v576 = vpop.permute.xlu0 %575
        %579 = vrot.lane.b32.xlu0 %v500, 16
        %v580 = vpop.permute.xlu0 %579
        %583 = vrot.lane.b32.xlu0 %v571, 24
        %v584 = vpop.permute.xlu0 %583
        %v586 = vsel %vm294, %v358, %v576
        %vm587 = vcmask 130048
        %v588 = vsel %vm587, %v586, %v580
        %vm589 = vcmask 195584
        %v590 = vsel %vm589, %v588, %v584
        %591 = vst.msk [vmem:[%s241] sm:$0xff] %vm270, %v590
        %v592 = vpack.c.bf16 %v590, %v590
        %v593 = vld [vmem:[%s2] sm:$0xf]
        %v594 = vld [vmem:[%s2 + $0x4] sm:$0xf]
        %v595 = vld [vmem:[%s2 + $0x8] sm:$0xf]
        %v596 = vld [vmem:[%s2 + $0xc] sm:$0xf]
        %v601 = vunpack.c.l.b16 %v593
        %v602 = vunpack.c.l.b16 %v594
        %v603 = vunpack.c.l.b16 %v595
        %v604 = vunpack.c.l.b16 %v596
        %v605 = vpack.c.b16 %v602, %v601
        %v606 = vpack.c.b16 %v604, %v603
        %v610 = vsel %vm270, %v592, 0
        %612 = vmatpush.bf16.msra.mxu0 0
        %613 = vmatpush.bf16.msra.mxu0 0
        %614 = vmatpush.bf16.msra.mxu0 0
        %615 = vmatpush.bf16.msra.mxu0 0
        %616 = vmatpush.bf16.msra.mxu0 0
        %617 = vmatpush.bf16.msra.mxu0 0
        %618 = vmatpush.bf16.msra.mxu0 %v606
        %619 = vmatpush.bf16.msra.mxu0 %v605
        %620 = vmatmul.bf16.gmra.mxu0 %v610
        %v621 = vpop.f32.mrf.mxu0
        %v622 = vadd.f32 0.0, %v621
        %v623 = vpop.f32.mrf.mxu0
        %624 = vdwg.mxu0
        %625 = vst.msk [vmem:[%s234] sm:$0xff] %vm270, %v622
        %s626 = sand.u32 %s125, 1
        %s627 = scalar_lea.sflag [#allocation3], %s626
        %s628 = sand.u32 %s125, 1
        %s629 = smul.addr %s628, 8
        %s630 = scalar_lea.vmem [#allocation2], %s629
        %s631 = sand.u32 %s151, 1
        %s632 = scalar_lea.sflag [#allocation5], %s631
        %s633 = sand.u32 %s151, 1
        %s634 = smul.addr %s633, 8
        %s635 = scalar_lea.vmem [#allocation4], %s634
        // Predicated region
        $region37: #{biased_attention.1} parent=35 // pred_check
          %p636 = pneg %p135
        $region38: #{biased_attention.1} parent=35 // pred_check_branch
          %638 = sbr.rel (%p636) target = $region40
        $region39: #{biased_attention.1} parent=35 // pred_region
          %640 = vsyncadd %s627, 0
          %s641 = smul.addr %s23, 8
          %s642 = scalar_lea.hbm %s4, %s641
          %s644 = sshll.u32 %s630, 4
          %s645 = int_to_ptr.vmem [resolvable:$true] %s644
          %s646 = sshll.u32 %s642, 4
          %s647 = int_to_ptr.hbm [resolvable:$true] %s646
          %649 = dma.vmem_to_hbm [thread:$0]  %s645, 128, %s647, %s627
        $region40: #{biased_attention.1} parent=35 // pred_fallthru
          _
        // Predicated region
        $region41: #{biased_attention.1} parent=35 // pred_check
          %p650 = pneg %p161
        $region42: #{biased_attention.1} parent=35 // pred_check_branch
          %652 = sbr.rel (%p650) target = $region44
        $region43: #{biased_attention.1} parent=35 // pred_region
          %654 = vsyncadd %s632, 0
          %s655 = smul.addr %s23, 8
          %s656 = scalar_lea.hbm %s5, %s655
          %s658 = sshll.u32 %s635, 4
          %s659 = int_to_ptr.vmem [resolvable:$true] %s658
          %s660 = sshll.u32 %s656, 4
          %s661 = int_to_ptr.hbm [resolvable:$true] %s660
          %663 = dma.vmem_to_hbm [thread:$0]  %s659, 128, %s661, %s632
        $region44: #{biased_attention.1} parent=35 // pred_fallthru
          _
      $region36: #{biased_attention.1} parent=5 // pred_fallthru
        _
      %p664 = scmp.le.s32.totalorder 2, %s18
      // Predicated region
      $region45: #{biased_attention.1} parent=5 // pred_check
        %p665 = pneg %p664
      $region46: #{biased_attention.1} parent=5 // pred_check_branch
        %667 = sbr.rel (%p665) target = $region48
      $region47: #{biased_attention.1} parent=5 // pred_region
        %s668 = ssub.s32 %s18, 2
        // Predicated region
        $region49: #{biased_attention.1} parent=47 // pred_check
          %p669 = pneg %p141
        $region50: #{biased_attention.1} parent=47 // pred_check_branch
          %671 = sbr.rel (%p669) target = $region52
        $region51: #{biased_attention.1} parent=47 // pred_region
          %s672 = sand.u32 %s126, 1
          %s673 = scalar_lea.sflag [#allocation3], %s672
          %s674 = sand.u32 %s126, 1
          %s675 = smul.addr %s674, 8
          %s676 = scalar_lea.vmem [#allocation2], %s675
          %678 = dma.done %s673, 128
        $region52: #{biased_attention.1} parent=47 // pred_fallthru
          _
        // Predicated region
        $region53: #{biased_attention.1} parent=47 // pred_check
          %p679 = pneg %p167
        $region54: #{biased_attention.1} parent=47 // pred_check_branch
          %681 = sbr.rel (%p679) target = $region56
        $region55: #{biased_attention.1} parent=47 // pred_region
          %s682 = sand.u32 %s152, 1
          %s683 = scalar_lea.sflag [#allocation5], %s682
          %s684 = sand.u32 %s152, 1
          %s685 = smul.addr %s684, 8
          %s686 = scalar_lea.vmem [#allocation4], %s685
          %688 = dma.done %s683, 128
        $region56: #{biased_attention.1} parent=47 // pred_fallthru
          _
      $region48: #{biased_attention.1} parent=5 // pred_fallthru
        _
    $region6: #{biased_attention.1} parent=1 // loop_footer
      %s22 = sadd.s32 1, %s18
    $region7: #{biased_attention.1} parent=1 // loop_footer_branch
      %17 = sbr.rel target = $region3
    $region8: #{biased_attention.1} parent=1 // loop_exit
      _
    %689 = vsyncpa [#allocation3], 1
    %s690 = scalar_lea.sflag [#allocation3], 1
    %691 = vsyncpa %s690, 1
    %692 = vsyncpa [#allocation5], 1
    %s693 = scalar_lea.sflag [#allocation5], 1
    %694 = vsyncpa %s693, 1

</llo_original>
